<compile_context>
chip_gen: v6e
topology: v6e:2x2x1
jax: 0.10.0
libtpu: 0.0.40
codegen_flags: <defaults>
</compile_context>

<pallas_src>
import math

import jax
import jax.numpy as jnp
from jax.experimental import pallas as pl
from jax.experimental.pallas import tpu as pltpu


# ----------------------------- kernels ------------------------------------ #

def _layer_scale_kernel(x_ref, g_ref, o_ref):
    # x_ref: (TM, C) row tile, g_ref: (1, C) gamma row (sublane-broadcast),
    # o_ref: (TM, C).  Pure VPU elementwise multiply in the input dtype.
    o_ref[...] = x_ref[...] * g_ref[...]


def _layer_scale_residual_kernel(r_ref, x_ref, g_ref, o_ref):
    # Fused residual: o = r + x * gamma, one HBM pass instead of two.
    o_ref[...] = r_ref[...] + x_ref[...] * g_ref[...]


# --------------------------- tiling helpers -------------------------------- #

def _round_up(a, b):
    return ((a + b - 1) // b) * b


def _sublane_multiple(dtype):
    # Sub-32-bit dtypes pack along sublanes: 8 rows (f32), 16 (bf16), 32 (int8/fp8).
    itemsize = jnp.dtype(dtype).itemsize
    return max(8, 32 // itemsize)


def _pick_row_tile(m_rows, c_lanes, dtype, *, target_tile_bytes=4 << 20,
                   min_grid_steps=8):
    """Row tile sized by bytes (~target_tile_bytes of x per step), rounded to the
    dtype's sublane multiple, while keeping >= min_grid_steps grid steps so the
    'parallel' grid axis can be sharded across TensorCores."""
    sub = _sublane_multiple(dtype)
    row_bytes = c_lanes * jnp.dtype(dtype).itemsize
    tm_bytes = max(sub, (target_tile_bytes // row_bytes) // sub * sub)
    tm_steps = max(sub, _round_up(pl.cdiv(m_rows, min_grid_steps), sub))
    tm = min(tm_bytes, tm_steps)
    tm = min(tm, _round_up(m_rows, sub))   # never larger than (padded) row count
    return tm


def _row_fold_factor(m_rows, c_lanes):
    """If C is not a multiple of 128, fold k rows into the lane dim so the
    output lane width becomes a multiple of 128 (unmasked vst)."""
    if c_lanes % 128 == 0:
        return 1
    k = 128 // math.gcd(c_lanes, 128)
    if k > 1 and m_rows % k == 0:
        return k
    return 1


# ------------------------------ wrapper ------------------------------------ #

def layer_scale(x, gamma, *, residual=None, target_tile_bytes=4 << 20):
    """LayerScale forward: y = x * gamma (gamma broadcast over the last dim).

    If `residual` is given, computes residual + x * gamma in the same pass
    (useful for `x + drop_path(ls(f(x)))` call sites).
    """
    *lead, C = x.shape
    assert gamma.shape == (C,), f"gamma must have shape ({C},), got {gamma.shape}"

    M = 1
    for d in lead:
        M *= d

    dtype = x.dtype
    g = gamma.astype(dtype)                 # compute in the input dtype

    # Lane-densify: fold rows into lanes when C is off the 128 grain.
    k = _row_fold_factor(M, C)
    Mk, Ck = M // k, C * k
    x2 = x.reshape(Mk, Ck)
    g2 = (jnp.tile(g, k) if k > 1 else g).reshape(1, Ck)

    tm = _pick_row_tile(Mk, Ck, dtype, target_tile_bytes=target_tile_bytes)
    grid = (pl.cdiv(Mk, tm),)               # ragged last block is handled by Pallas

    row_spec = pl.BlockSpec((tm, Ck), lambda i: (i, 0))
    gamma_spec = pl.BlockSpec((1, Ck), lambda i: (0, 0))   # grid-invariant row

    if residual is None:
        kernel = _layer_scale_kernel
        in_specs = [row_spec, gamma_spec]
        args = (x2, g2)
    else:
        assert residual.shape == x.shape and residual.dtype == dtype
        kernel = _layer_scale_residual_kernel
        in_specs = [row_spec, row_spec, gamma_spec]
        args = (residual.reshape(Mk, Ck), x2, g2)

    out = pl.pallas_call(
        kernel,
        out_shape=jax.ShapeDtypeStruct((Mk, Ck), dtype),
        grid_spec=pl.GridSpec(
            grid=grid,
            in_specs=in_specs,
            out_specs=row_spec,
        ),
        compiler_params=pltpu.CompilerParams(
            dimension_semantics=("parallel",),   # shard rows across TCs (v7x/megacore)
            vmem_limit_bytes=32 << 20,           # covers v5e's 16 MiB scoped default
        ),
    )(*args)
    return out.reshape(x.shape)


def layer_scale_reference(x, gamma, residual=None):
    """Pure-JAX reference (matches torch: x * self.gamma)."""
    y = x * gamma.astype(x.dtype)
    return y if residual is None else residual + y


# -------------------------------- demo -------------------------------------- #

if __name__ == "__main__":
    key = jax.random.PRNGKey(0)
    k1, k2, k3, k4, k5, k6, k7 = jax.random.split(key, 7)

    # Case 1: ViT-like tokens, C = 128 (lane-dense), f32.
    B, N, C = 2, 16, 128
    x1 = jax.random.normal(k1, (B, N, C), jnp.float32)
    g1 = 1e-5 * jnp.ones((C,), jnp.float32) + 0.1 * jax.random.normal(k2, (C,), jnp.float32)
    o1 = jax.block_until_ready(layer_scale(x1, g1))
    assert o1.shape == x1.shape
    assert jnp.allclose(o1, layer_scale_reference(x1, g1), atol=1e-6, rtol=1e-6)

    # Case 2: C = 96 (not a multiple of 128) -> rows folded into lanes (k = 4).
    x2 = jax.random.normal(k3, (4, 24, 96), jnp.float32)
    g2 = 1e-5 * jnp.ones((96,), jnp.float32) + 0.1 * jax.random.normal(k4, (96,), jnp.float32)
    o2 = jax.block_until_ready(layer_scale(x2, g2))
    assert jnp.allclose(o2, layer_scale_reference(x2, g2), atol=1e-6, rtol=1e-6)

    # Case 3: bf16 input (sublane multiple of 16).
    x3 = jax.random.normal(k5, (2, 64, 128), jnp.float32).astype(jnp.bfloat16)
    g3 = (1e-5 * jnp.ones((128,), jnp.float32)
          + 0.1 * jax.random.normal(k6, (128,), jnp.float32))
    o3 = jax.block_until_ready(layer_scale(x3, g3))
    assert jnp.allclose(o3.astype(jnp.float32),
                        layer_scale_reference(x3, g3).astype(jnp.float32),
                        atol=1e-2, rtol=1e-2)

    # Case 4: fused residual path (r + x * gamma) in a single HBM pass.
    r4 = jax.random.normal(k7, (B, N, C), jnp.float32)
    o4 = jax.block_until_ready(layer_scale(x1, g1, residual=r4))
    assert jnp.allclose(o4, layer_scale_reference(x1, g1, residual=r4),
                        atol=1e-6, rtol=1e-6)

    print("KERNEL_OK")
</pallas_src>

<mosaic_0001>
module attributes {stable_mosaic.version = 11 : i64} {
  func.func @_layer_scale_kernel(%arg0: i32, %arg1: memref<8x128xf32, #tpu.memory_space<vmem>>, %arg2: memref<1x128xf32, #tpu.memory_space<vmem>>, %arg3: memref<8x128xf32, #tpu.memory_space<vmem>>) attributes {dimension_semantics = [#tpu.dimension_semantics<parallel>], iteration_bounds = array<i64: 4>, scalar_prefetch = 0 : i64, scratch_operands = 0 : i64, tpu.core_type = #tpu.core_type<tc>, window_params = [{transform_indices = @transform_0, window_bounds = array<i64: 8, 128>}, {pipeline_mode = #tpu.pipeline_mode<synchronous>, transform_indices = @transform_1, window_bounds = array<i64: 1, 128>}, {transform_indices = @transform_2, window_bounds = array<i64: 8, 128>}]} {
    %c0 = arith.constant 0 : index
    %c0_0 = arith.constant 0 : index
    %0 = vector.load %arg1[%c0, %c0_0] : memref<8x128xf32, #tpu.memory_space<vmem>>, vector<8x128xf32>
    %c0_1 = arith.constant 0 : index
    %c0_2 = arith.constant 0 : index
    %1 = vector.load %arg2[%c0_1, %c0_2] : memref<1x128xf32, #tpu.memory_space<vmem>>, vector<1x128xf32>
    %2 = vector.broadcast %1 : vector<1x128xf32> to vector<8x128xf32>
    %3 = arith.mulf %0, %2 : vector<8x128xf32>
    %c0_3 = arith.constant 0 : index
    %c0_4 = arith.constant 0 : index
    %4 = vector.load %arg3[%c0_3, %c0_4] : memref<8x128xf32, #tpu.memory_space<vmem>>, vector<8x128xf32>
    tpu.vector_store %arg3[%c0_3, %c0_4], %3 {strides = array<i32>} : memref<8x128xf32, #tpu.memory_space<vmem>>, vector<8x128xf32>,
    return
  }
  func.func @transform_0(%arg0: i32) -> (i32, i32) {
    %c0_i32 = arith.constant 0 : i32
    %c0_i32_0 = arith.constant 0 : i32
    return %arg0, %c0_i32 : i32, i32
  }
  func.func @transform_1(%arg0: i32) -> (i32, i32) {
    %c0_i32 = arith.constant 0 : i32
    %c0_i32_0 = arith.constant 0 : i32
    %c0_i32_1 = arith.constant 0 : i32
    return %c0_i32, %c0_i32_0 : i32, i32
  }
  func.func @transform_2(%arg0: i32) -> (i32, i32) {
    %c0_i32 = arith.constant 0 : i32
    %c0_i32_0 = arith.constant 0 : i32
    return %arg0, %c0_i32 : i32, i32
  }
}

</mosaic_0001>

<llo_original>
// kernel: tpu_custom_call.1
$region0: #{tpu_custom_call.1}
  #allocation0 [shape = 'u32[]', space=smem, size = 0x4, offset = 0x4, fixed_abs, tag = 'smem constant byte address 0x4 - core index']
  #allocation1 [shape = 'u32[144,128]{1,0:T(1,128)}', space=vmem, size = 0x12000, scoped, tag = 'internal scratch']
  %s0 = inlined_call_operand.hbm [shape: f32[32,128], index: 0, kind: input, shape index: {}]
  %s1 = inlined_call_operand.vmem [shape: f32[1,128], index: 1, kind: input, shape index: {}]
  %s2 = inlined_call_operand.hbm [shape: f32[32,128], index: 2, kind: output, shape index: {}]
  %s3 = sld [smem:[#allocation0]]
  $region45: #{tpu_custom_call.1} parent=0
    _
  %s5 = ssub.s32 1, %s3
  %s6 = scalar_select 0, %s5, %s3
  $region1: #{tpu_custom_call.1} parent=0
    #allocation2 [shape = 'u8[8192]{0}', space=vmem, size = 0x2000, scoped, tag = 'input window, operand 0']
    #allocation3 [shape = 's32[2]{0}', space=sflag, size = 0x8, scoped, tag = 'scoped memory for tpu_custom_call.1']
    #allocation4 [shape = 's32[2]{0}', space=sflag, size = 0x8, scoped, tag = 'scoped memory for tpu_custom_call.1']
    #allocation5 [shape = 'u8[8192]{0}', space=vmem, size = 0x2000, scoped, tag = 'output window, operand 0']
    %7 = vsyncpa [#allocation3], 0
    %s8 = scalar_lea.sflag [#allocation3], 1
    %9 = vsyncpa %s8, 0
    %10 = vsyncpa [#allocation4], 0
    %s11 = scalar_lea.sflag [#allocation4], 1
    %12 = vsyncpa %s11, 0
    loop: start=0, step=1, limit=6
    $region2: #{tpu_custom_call.1} parent=1 // loop_pre_header
      _
    $region3: #{tpu_custom_call.1} parent=1 // loop_header
      %s14 = sphi 0, %s18
      %p15 = scmp.ge.s32.totalorder %s14, 6
      %s24 = sphi 0, %s26
      %s27 = sphi 0, %s24
      %s28 = sphi 0, %s27
      %s44 = sphi 0, %s28
      %s48 = sphi 0, %s48
      %s50 = sphi 0, %s48
      %s51 = sphi 0, %s50
      %s65 = sphi 0, %s51
      %s71 = sphi 0, %s73
      %s74 = sphi 0, %s71
      %s75 = sphi 0, %s74
      %s91 = sphi 0, %s75
    $region4: #{tpu_custom_call.1} parent=1 // loop_header_branch
      %17 = sbr.rel (%p15) target = $region8
    $region5: #{tpu_custom_call.1} parent=1 // loop_body
      %s19 = ssub.s32 %s14, 1
      %s20 = ssub.s32 %s14, 2
      %s21 = sadd.s32 %s14, 1
      %s22 = ssub.s32 %s14, %s21
      %p23 = scmp.eq.s32.totalorder %s22, 0
      %s25 = sadd.s32 %s24, 1
      %s26 = scalar_select %p23, %s24, %s25
      %p29 = pneg %p23
      %p30 = scmp.eq.s32.totalorder %s14, 3
      %p31 = por %p29, %p30
      %p32 = scmp.ne.s32.totalorder %s24, %s27
      %p33 = scmp.eq.s32.totalorder %s14, 0
      %p34 = por %p32, %p33
      %p35 = scmp.ne.s32.totalorder %s24, %s27
      %p36 = scmp.eq.s32.totalorder %s19, 3
      %p37 = por %p35, %p36
      %p38 = scmp.ne.s32.totalorder %s27, %s28
      %p39 = scmp.eq.s32.totalorder %s19, 0
      %p40 = por %p38, %p39
      %p41 = scmp.ne.s32.totalorder %s27, %s28
      %p42 = scmp.eq.s32.totalorder %s20, 3
      %p43 = por %p41, %p42
      %p45 = scmp.ne.s32.totalorder %s28, %s44
      %p46 = scmp.eq.s32.totalorder %s20, 0
      %p47 = por %p45, %p46
      %s49 = sadd.s32 %s48, 1
      %p52 = scmp.eq.s32.totalorder %s14, 3
      %p53 = scmp.ne.s32.totalorder %s48, %s50
      %p54 = scmp.eq.s32.totalorder %s14, 0
      %p55 = por %p53, %p54
      %p56 = scmp.ne.s32.totalorder %s48, %s50
      %p57 = scmp.eq.s32.totalorder %s19, 3
      %p58 = por %p56, %p57
      %p59 = scmp.ne.s32.totalorder %s50, %s51
      %p60 = scmp.eq.s32.totalorder %s19, 0
      %p61 = por %p59, %p60
      %p62 = scmp.ne.s32.totalorder %s50, %s51
      %p63 = scmp.eq.s32.totalorder %s20, 3
      %p64 = por %p62, %p63
      %p66 = scmp.ne.s32.totalorder %s51, %s65
      %p67 = scmp.eq.s32.totalorder %s20, 0
      %p68 = por %p66, %p67
      %s69 = ssub.s32 %s14, %s21
      %p70 = scmp.eq.s32.totalorder %s69, 0
      %s72 = sadd.s32 %s71, 1
      %s73 = scalar_select %p70, %s71, %s72
      %p76 = pneg %p70
      %p77 = scmp.eq.s32.totalorder %s14, 3
      %p78 = por %p76, %p77
      %p79 = scmp.ne.s32.totalorder %s71, %s74
      %p80 = scmp.eq.s32.totalorder %s14, 0
      %p81 = por %p79, %p80
      %p82 = scmp.ne.s32.totalorder %s71, %s74
      %p83 = scmp.eq.s32.totalorder %s19, 3
      %p84 = por %p82, %p83
      %p85 = scmp.ne.s32.totalorder %s74, %s75
      %p86 = scmp.eq.s32.totalorder %s19, 0
      %p87 = por %p85, %p86
      %p88 = scmp.ne.s32.totalorder %s74, %s75
      %p89 = scmp.eq.s32.totalorder %s20, 3
      %p90 = por %p88, %p89
      %p92 = scmp.ne.s32.totalorder %s75, %s91
      %p93 = scmp.eq.s32.totalorder %s20, 0
      %p94 = por %p92, %p93
      %p95 = scmp.le.s32.totalorder 1, %s14
      %p96 = scmp.lt.s32.totalorder %s14, 5
      %p97 = pnand %p95, %p96
      %p98 = pneg %p97
      // Predicated region
      $region9: #{tpu_custom_call.1} parent=5 // pred_check
        _
      $region10: #{tpu_custom_call.1} parent=5 // pred_check_branch
        %100 = sbr.rel (%p97) target = $region12
      $region11: #{tpu_custom_call.1} parent=5 // pred_region
        %s101 = ssub.s32 %s14, 1
        // Predicated region
        $region13: #{tpu_custom_call.1} parent=11 // pred_check
          %p102 = pneg %p61
        $region14: #{tpu_custom_call.1} parent=11 // pred_check_branch
          %104 = sbr.rel (%p102) target = $region16
        $region15: #{tpu_custom_call.1} parent=11 // pred_region
          _
        $region16: #{tpu_custom_call.1} parent=11 // pred_fallthru
          _
      $region12: #{tpu_custom_call.1} parent=5 // pred_fallthru
        _
      %p105 = scmp.lt.s32.totalorder %s14, 4
      // Predicated region
      $region17: #{tpu_custom_call.1} parent=5 // pred_check
        %p106 = pneg %p105
      $region18: #{tpu_custom_call.1} parent=5 // pred_check_branch
        %108 = sbr.rel (%p106) target = $region20
      $region19: #{tpu_custom_call.1} parent=5 // pred_region
        // Predicated region
        $region21: #{tpu_custom_call.1} parent=19 // pred_check
          %p109 = pneg %p34
        $region22: #{tpu_custom_call.1} parent=19 // pred_check_branch
          %111 = sbr.rel (%p109) target = $region24
        $region23: #{tpu_custom_call.1} parent=19 // pred_region
          %s112 = sand.u32 %s24, 1
          %s113 = scalar_lea.sflag [#allocation3], %s112
          %s114 = sand.u32 %s24, 1
          %s115 = smul.addr %s114, 8
          %s116 = scalar_lea.vmem [#allocation2], %s115
          %s118 = ssub.s32 128, 128
          %119 = vsyncadd %s113, %s118
          %s120 = smul.addr %s14, 128
          %s121 = scalar_lea.hbm %s0, %s120
          %s123 = sshll.u32 %s116, 4
          %s124 = int_to_ptr.vmem [resolvable:$true] %s123
          %126 = dma.hbm_to_vmem [thread:$0]  %s121, 128, %s124, %s113
        $region24: #{tpu_custom_call.1} parent=19 // pred_fallthru
          _
      $region20: #{tpu_custom_call.1} parent=5 // pred_fallthru
        _
      %p127 = scmp.le.s32.totalorder 1, %s14
      %p128 = scmp.lt.s32.totalorder %s14, 5
      %p129 = pnand %p127, %p128
      %p130 = pneg %p129
      // Predicated region
      $region25: #{tpu_custom_call.1} parent=5 // pred_check
        _
      $region26: #{tpu_custom_call.1} parent=5 // pred_check_branch
        %132 = sbr.rel (%p129) target = $region28
      $region27: #{tpu_custom_call.1} parent=5 // pred_region
        %s133 = ssub.s32 %s14, 1
        %s134 = sand.u32 %s27, 1
        %s135 = scalar_lea.sflag [#allocation3], %s134
        %s136 = sand.u32 %s27, 1
        %s137 = smul.addr %s136, 8
        %s138 = scalar_lea.vmem [#allocation2], %s137
        // Predicated region
        $region29: #{tpu_custom_call.1} parent=27 // pred_check
          %p139 = pneg %p40
        $region30: #{tpu_custom_call.1} parent=27 // pred_check_branch
          %141 = sbr.rel (%p139) target = $region32
        $region31: #{tpu_custom_call.1} parent=27 // pred_region
          %142 = dma.done %s135, 128
        $region32: #{tpu_custom_call.1} parent=27 // pred_fallthru
          _
        %s143 = sand.u32 %s27, 1
        %s144 = scalar_lea.sflag [#allocation3], %s143
        %s145 = sand.u32 %s27, 1
        %s146 = smul.addr %s145, 8
        %s147 = scalar_lea.vmem [#allocation2], %s146
        %p148 = pneg %p40
        %p149 = pneg %p37
        %p150 = pneg %p61
        %p151 = pneg %p58
        %p152 = pneg %p87
        %p153 = pneg %p84
        %s154 = sand.u32 %s74, 1
        %s155 = scalar_lea.sflag [#allocation4], %s154
        %s156 = sand.u32 %s74, 1
        %s157 = smul.addr %s156, 8
        %s158 = scalar_lea.vmem [#allocation5], %s157
        %v159 = vld [vmem:[%s138] sm:$0xff]
        %v160 = vld [vmem:[%s1] sm:$0x1]
        %v162 = vlaneseq
        %v163 = vshrl.u32 %v162, 7
        %v164 = vsub.s32 0, %v163
        %v165 = vrot.slane %v160, %v164
        %v167 = vmul.f32 %v159, %v165
        %168 = vst [vmem:[%s158] sm:$0xff] %v167
        %s169 = sand.u32 %s74, 1
        %s170 = scalar_lea.sflag [#allocation4], %s169
        %s171 = sand.u32 %s74, 1
        %s172 = smul.addr %s171, 8
        %s173 = scalar_lea.vmem [#allocation5], %s172
        // Predicated region
        $region33: #{tpu_custom_call.1} parent=27 // pred_check
          %p174 = pneg %p84
        $region34: #{tpu_custom_call.1} parent=27 // pred_check_branch
          %176 = sbr.rel (%p174) target = $region36
        $region35: #{tpu_custom_call.1} parent=27 // pred_region
          %s178 = ssub.s32 128, 128
          %179 = vsyncadd %s170, %s178
          %s180 = smul.addr %s19, 128
          %s181 = scalar_lea.hbm %s2, %s180
          %s183 = sshll.u32 %s173, 4
          %s184 = int_to_ptr.vmem [resolvable:$true] %s183
          %186 = dma.vmem_to_hbm [thread:$0]  %s184, 128, %s181, %s170
        $region36: #{tpu_custom_call.1} parent=27 // pred_fallthru
          _
      $region28: #{tpu_custom_call.1} parent=5 // pred_fallthru
        _
      %p187 = scmp.le.s32.totalorder 2, %s14
      // Predicated region
      $region37: #{tpu_custom_call.1} parent=5 // pred_check
        %p188 = pneg %p187
      $region38: #{tpu_custom_call.1} parent=5 // pred_check_branch
        %190 = sbr.rel (%p188) target = $region40
      $region39: #{tpu_custom_call.1} parent=5 // pred_region
        %s191 = ssub.s32 %s14, 2
        // Predicated region
        $region41: #{tpu_custom_call.1} parent=39 // pred_check
          %p192 = pneg %p90
        $region42: #{tpu_custom_call.1} parent=39 // pred_check_branch
          %194 = sbr.rel (%p192) target = $region44
        $region43: #{tpu_custom_call.1} parent=39 // pred_region
          %s195 = sand.u32 %s75, 1
          %s196 = scalar_lea.sflag [#allocation4], %s195
          %s197 = sand.u32 %s75, 1
          %s198 = smul.addr %s197, 8
          %s199 = scalar_lea.vmem [#allocation5], %s198
          %200 = dma.done %s196, 128
        $region44: #{tpu_custom_call.1} parent=39 // pred_fallthru
          _
      $region40: #{tpu_custom_call.1} parent=5 // pred_fallthru
        _
    $region6: #{tpu_custom_call.1} parent=1 // loop_footer
      %s18 = sadd.s32 1, %s14
    $region7: #{tpu_custom_call.1} parent=1 // loop_footer_branch
      %13 = sbr.rel target = $region3
    $region8: #{tpu_custom_call.1} parent=1 // loop_exit
      _
    %201 = vsyncpa [#allocation3], 1
    %s202 = scalar_lea.sflag [#allocation3], 1
    %203 = vsyncpa %s202, 1
    %204 = vsyncpa [#allocation4], 1
    %s205 = scalar_lea.sflag [#allocation4], 1
    %206 = vsyncpa %s205, 1

</llo_original>
